<compile_context>
chip_gen: v6e
topology: v6e:2x2x1
jax: 0.10.0
libtpu: 0.0.40
codegen_flags: <defaults>
</compile_context>

<pallas_src>
import jax
import jax.numpy as jnp
from jax.experimental import pallas as pl
from jax.experimental.pallas import tpu as pltpu

_LANE = 128      # lane width (last dim)
_SUBLANE = 8     # f32 sublane width (second-to-last dim)


def _rup(x, m):
    return ((x + m - 1) // m) * m


def _coordnet_mlp_kernel(x_ref, w0, b0, w1, b1, w2, b2, w3, b3, o_ref):
    """Fused 4-layer MLP for one M-tile.

    x_ref: (tm, in_f) f32           w0: (in_f, ep) f32   b0: (1, ep) f32
    w1: (ep, hp) bf16               b1: (1, hp) f32
    w2: (hp, hp) bf16               b2: (1, hp) f32
    w3: (out_f, hp) f32             b3: (out_f,) f32 in SMEM
    o_ref: (tm, out_f) f32
    """
    x = x_ref[...]                              # (tm, in_f) f32
    in_f = x.shape[1]
    out_f = o_ref.shape[1]

    # ---- layer 0: Linear(in_f -> emb) + ReLU, as rank-1 VPU FMAs ----------
    h = x[:, 0:1] * w0[0:1, :]
    for k in range(1, in_f):
        h = h + x[:, k:k + 1] * w0[k:k + 1, :]
    h = jnp.maximum(h + b0[...], 0.0)           # (tm, ep) f32

    # ---- layers 1 & 2: 128x128 hidden matmuls on MXU, bf16 in / f32 acc ---
    h = jnp.dot(h.astype(jnp.bfloat16), w1[...],
                preferred_element_type=jnp.float32) + b1[...]
    h = jnp.maximum(h, 0.0)
    h = jnp.dot(h.astype(jnp.bfloat16), w2[...],
                preferred_element_type=jnp.float32) + b2[...]
    h = jnp.maximum(h, 0.0)                     # (tm, hp) f32

    # ---- layer 3: Linear(hidden -> out_f), out_f tiny -> lane reduction ----
    cols = []
    for j in range(out_f):
        c = jnp.sum(h * w3[j:j + 1, :], axis=-1, keepdims=True) + b3[j]
        cols.append(c)
    out = cols[0] if out_f == 1 else jnp.concatenate(cols, axis=-1)
    o_ref[...] = out.astype(o_ref.dtype)


def prepare_coordnet_params(w0, b0, w1, b1, w2, b2, w3, b3):
    """One-time parameter prep (NOT in the per-call hot path).

    Takes PyTorch nn.Linear layout weights (out_features, in_features) and 1-D
    biases; returns lane-padded, kernel-layout copies:
      w0 -> (in, ep) f32 (transposed, VPU path)
      w1 -> (ep, hp) bf16, w2 -> (hp, hp) bf16 (transposed, MXU path)
      w3 -> (out, hp) f32 (row layout, XLU reduction path)
    Zero padding is exact: padded columns stay 0 through ReLU and padded
    weight rows/cols contribute nothing, so results are unchanged.
    """
    in_features = int(w0.shape[1])
    emb_features = int(w0.shape[0])
    hidden_features = int(w1.shape[0])
    out_features = int(w3.shape[0])

    ep = _rup(emb_features, _LANE)
    hp = _rup(hidden_features, _LANE)

    def padT(w, kin_p, kout_p, dtype):
        n, k = w.shape
        wt = jnp.zeros((kin_p, kout_p), jnp.float32)
        wt = wt.at[:k, :n].set(jnp.asarray(w, jnp.float32).T)
        return wt.astype(dtype)

    def pad_bias_row(b, kout_p):
        n = b.shape[0]
        bp = jnp.zeros((1, kout_p), jnp.float32)
        return bp.at[0, :n].set(jnp.asarray(b, jnp.float32))

    p = {}
    p["w0"] = padT(w0, in_features, ep, jnp.float32)          # (in, ep) f32
    p["b0"] = pad_bias_row(b0, ep)                            # (1, ep) f32
    p["w1"] = padT(w1, ep, hp, jnp.bfloat16)                  # (ep, hp) bf16
    p["b1"] = pad_bias_row(b1, hp)                            # (1, hp) f32
    p["w2"] = padT(w2, hp, hp, jnp.bfloat16)                  # (hp, hp) bf16
    p["b2"] = pad_bias_row(b2, hp)                            # (1, hp) f32
    w3p = jnp.zeros((out_features, hp), jnp.float32)
    p["w3"] = w3p.at[:, :hidden_features].set(jnp.asarray(w3, jnp.float32))
    p["b3"] = jnp.asarray(b3, jnp.float32)                    # (out,) SMEM
    p["dims"] = (in_features, out_features, ep, hp)
    return p


def coordnet_forward(coords, prepped, *, tm=None):
    """Pallas equivalent of CoordNetSmall.forward.

    coords: (B, N, in_features) float32
    returns (output (B, N, out_features), coords)
    """
    in_features, out_features, ep, hp = prepped["dims"]
    B, N, d = coords.shape
    assert d == in_features
    M = B * N
    x = coords.reshape(M, d).astype(jnp.float32)

    if tm is None:
        # Small M: a single grid step (avoids per-step overhead; the grid is a
        # serial loop on v5e/v6e and splitting tiny work on v7x buys nothing).
        # Large M: tm=1024 amortizes pipeline overhead / MXU RHS pushes, and
        # the "parallel" grid axis lets v7x's two TensorCores share steps.
        cap = 1024
        tm = max(_SUBLANE, _rup(M, _SUBLANE)) if M <= cap else cap
    mp = _rup(M, tm)
    if mp != M:
        x = jnp.pad(x, ((0, mp - M), (0, 0)))   # tiny: only the ragged M rows

    full = lambda i: (0, 0)
    out_padded = pl.pallas_call(
        _coordnet_mlp_kernel,
        out_shape=jax.ShapeDtypeStruct((mp, out_features), jnp.float32),
        grid_spec=pltpu.PrefetchScalarGridSpec(
            num_scalar_prefetch=0,
            grid=(mp // tm,),
            in_specs=[
                pl.BlockSpec((tm, in_features), lambda i: (i, 0)),        # x
                pl.BlockSpec((in_features, ep), full),                    # w0
                pl.BlockSpec((1, ep), full),                              # b0
                pl.BlockSpec((ep, hp), full),                             # w1
                pl.BlockSpec((1, hp), full),                              # b1
                pl.BlockSpec((hp, hp), full),                             # w2
                pl.BlockSpec((1, hp), full),                              # b2
                pl.BlockSpec((out_features, hp), full),                   # w3
                pl.BlockSpec(memory_space=pltpu.MemorySpace.SMEM),        # b3
            ],
            out_specs=pl.BlockSpec((tm, out_features), lambda i: (i, 0)),
        ),
        compiler_params=pltpu.CompilerParams(
            dimension_semantics=("parallel",),
        ),
    )(x, prepped["w0"], prepped["b0"], prepped["w1"], prepped["b1"],
      prepped["w2"], prepped["b2"], prepped["w3"], prepped["b3"])

    output = out_padded[:M, :].reshape(B, N, out_features)
    # TODO(synk): coords.clone().detach().requires_grad_(True) is PyTorch
    # autograd bookkeeping only; coords is returned unchanged (use jax.grad
    # w.r.t. coords outside if gradients are needed).
    return output, coords


if __name__ == "__main__":
    # Small shapes consistent with CoordNetSmall: a batch of coordinate sets.
    B, N = 2, 64
    in_features, emb_features, hidden_features, out_features = 3, 32, 64, 1

    key = jax.random.PRNGKey(0)
    ks = jax.random.split(key, 9)

    coords = jax.random.normal(ks[0], (B, N, in_features), dtype=jnp.float32)

    def relu_layer_init(kw, kb, fan_in, fan_out):
        # ReLULayer: weight ~ U(-1/in, 1/in); bias keeps PyTorch Linear default
        # U(-1/sqrt(in), 1/sqrt(in)).
        wb = 1.0 / fan_in
        bb = 1.0 / (fan_in ** 0.5)
        w = jax.random.uniform(kw, (fan_out, fan_in), jnp.float32, -wb, wb)
        b = jax.random.uniform(kb, (fan_out,), jnp.float32, -bb, bb)
        return w, b

    def linear_init(kw, kb, fan_in, fan_out):
        bb = 1.0 / (fan_in ** 0.5)
        w = jax.random.uniform(kw, (fan_out, fan_in), jnp.float32, -bb, bb)
        b = jax.random.uniform(kb, (fan_out,), jnp.float32, -bb, bb)
        return w, b

    # emb: ReLULayer(in, emb); head: ReLULayer(emb, hid), ReLULayer(hid, hid),
    # Linear(hid, out)
    w0, b0 = relu_layer_init(ks[1], ks[2], in_features, emb_features)
    w1, b1 = relu_layer_init(ks[3], ks[4], emb_features, hidden_features)
    w2, b2 = relu_layer_init(ks[5], ks[6], hidden_features, hidden_features)
    w3, b3 = linear_init(ks[7], ks[8], hidden_features, out_features)

    prepped = prepare_coordnet_params(w0, b0, w1, b1, w2, b2, w3, b3)

    output, coords_out = coordnet_forward(coords, prepped)
    output = jax.block_until_ready(output)

    # Plain-JAX f32 reference with the unpadded parameters.
    def ref_forward(c):
        h = jnp.maximum(c @ w0.T + b0, 0.0)
        h = jnp.maximum(h @ w1.T + b1, 0.0)
        h = jnp.maximum(h @ w2.T + b2, 0.0)
        return h @ w3.T + b3

    ref = ref_forward(coords)
    assert output.shape == (B, N, out_features)
    assert coords_out.shape == coords.shape
    # Hidden matmuls use bf16 operands (f32 accumulation), so compare with a
    # slightly relaxed tolerance against the f32 reference.
    assert jnp.allclose(output, ref, atol=1e-2, rtol=1e-2), (
        float(jnp.max(jnp.abs(output - ref))))

    print("KERNEL_OK")
</pallas_src>

<mosaic_0001>
module attributes {stable_mosaic.version = 11 : i64} {
  func.func @_coordnet_mlp_kernel(%arg0: i32, %arg1: memref<128x3xf32, #tpu.memory_space<vmem>>, %arg2: memref<3x128xf32, #tpu.memory_space<vmem>>, %arg3: memref<1x128xf32, #tpu.memory_space<vmem>>, %arg4: memref<128x128xbf16, #tpu.memory_space<vmem>>, %arg5: memref<1x128xf32, #tpu.memory_space<vmem>>, %arg6: memref<128x128xbf16, #tpu.memory_space<vmem>>, %arg7: memref<1x128xf32, #tpu.memory_space<vmem>>, %arg8: memref<1x128xf32, #tpu.memory_space<vmem>>, %arg9: memref<1xf32, #tpu.memory_space<smem>>, %arg10: memref<128x1xf32, #tpu.memory_space<vmem>>) attributes {dimension_semantics = [#tpu.dimension_semantics<parallel>], iteration_bounds = array<i64: 1>, scalar_prefetch = 0 : i64, scratch_operands = 0 : i64, tpu.core_type = #tpu.core_type<tc>, window_params = [{transform_indices = @transform_0, window_bounds = array<i64: 128, 3>}, {pipeline_mode = #tpu.pipeline_mode<synchronous>, transform_indices = @transform_1, window_bounds = array<i64: 3, 128>}, {pipeline_mode = #tpu.pipeline_mode<synchronous>, transform_indices = @transform_2, window_bounds = array<i64: 1, 128>}, {pipeline_mode = #tpu.pipeline_mode<synchronous>, transform_indices = @transform_3, window_bounds = array<i64: 128, 128>}, {pipeline_mode = #tpu.pipeline_mode<synchronous>, transform_indices = @transform_4, window_bounds = array<i64: 1, 128>}, {pipeline_mode = #tpu.pipeline_mode<synchronous>, transform_indices = @transform_5, window_bounds = array<i64: 128, 128>}, {pipeline_mode = #tpu.pipeline_mode<synchronous>, transform_indices = @transform_6, window_bounds = array<i64: 1, 128>}, {pipeline_mode = #tpu.pipeline_mode<synchronous>, transform_indices = @transform_7, window_bounds = array<i64: 1, 128>}, {transform_indices = @transform_8, window_bounds = array<i64: 1>}, {transform_indices = @transform_9, window_bounds = array<i64: 128, 1>}]} {
    %c0 = arith.constant 0 : index
    %c0_0 = arith.constant 0 : index
    %0 = vector.load %arg1[%c0, %c0_0] : memref<128x3xf32, #tpu.memory_space<vmem>>, vector<128x3xf32>
    %1 = vector.extract_strided_slice %0 {offsets = [0, 0], sizes = [128, 1], strides = [1, 1]} : vector<128x3xf32> to vector<128x1xf32>
    %c0_1 = arith.constant 0 : index
    %c0_2 = arith.constant 0 : index
    %2 = vector.load %arg2[%c0_1, %c0_2] : memref<3x128xf32, #tpu.memory_space<vmem>>, vector<1x128xf32>
    %3 = vector.broadcast %1 : vector<128x1xf32> to vector<128x128xf32>
    %4 = vector.broadcast %2 : vector<1x128xf32> to vector<128x128xf32>
    %5 = arith.mulf %3, %4 : vector<128x128xf32>
    %6 = vector.extract_strided_slice %0 {offsets = [0, 1], sizes = [128, 1], strides = [1, 1]} : vector<128x3xf32> to vector<128x1xf32>
    %c1 = arith.constant 1 : index
    %c0_3 = arith.constant 0 : index
    %7 = vector.load %arg2[%c1, %c0_3] : memref<3x128xf32, #tpu.memory_space<vmem>>, vector<1x128xf32>
    %8 = vector.broadcast %6 : vector<128x1xf32> to vector<128x128xf32>
    %9 = vector.broadcast %7 : vector<1x128xf32> to vector<128x128xf32>
    %10 = arith.mulf %8, %9 : vector<128x128xf32>
    %11 = arith.addf %5, %10 : vector<128x128xf32>
    %12 = vector.extract_strided_slice %0 {offsets = [0, 2], sizes = [128, 1], strides = [1, 1]} : vector<128x3xf32> to vector<128x1xf32>
    %c2 = arith.constant 2 : index
    %c0_4 = arith.constant 0 : index
    %13 = vector.load %arg2[%c2, %c0_4] : memref<3x128xf32, #tpu.memory_space<vmem>>, vector<1x128xf32>
    %14 = vector.broadcast %12 : vector<128x1xf32> to vector<128x128xf32>
    %15 = vector.broadcast %13 : vector<1x128xf32> to vector<128x128xf32>
    %16 = arith.mulf %14, %15 : vector<128x128xf32>
    %17 = arith.addf %11, %16 : vector<128x128xf32>
    %c0_5 = arith.constant 0 : index
    %c0_6 = arith.constant 0 : index
    %18 = vector.load %arg3[%c0_5, %c0_6] : memref<1x128xf32, #tpu.memory_space<vmem>>, vector<1x128xf32>
    %19 = vector.broadcast %18 : vector<1x128xf32> to vector<128x128xf32>
    %20 = arith.addf %17, %19 : vector<128x128xf32>
    %cst = arith.constant 0.000000e+00 : f32
    %21 = vector.broadcast %cst : f32 to vector<128x128xf32>
    %22 = arith.maximumf %20, %21 : vector<128x128xf32>
    %23 = arith.truncf %22 : vector<128x128xf32> to vector<128x128xbf16>
    %c0_7 = arith.constant 0 : index
    %c0_8 = arith.constant 0 : index
    %24 = vector.load %arg4[%c0_7, %c0_8] : memref<128x128xbf16, #tpu.memory_space<vmem>>, vector<128x128xbf16>
    %cst_9 = arith.constant dense<0.000000e+00> : vector<128x128xf32>
    %25 = tpu.matmul %23, %24, %cst_9 {dimension_numbers = #tpu.dot_dimension_numbers<[1], [0], [0], [1], [0, 0, 1, 1], [], []>} : vector<128x128xbf16>, vector<128x128xbf16>, vector<128x128xf32> -> vector<128x128xf32>
    %c0_10 = arith.constant 0 : index
    %c0_11 = arith.constant 0 : index
    %26 = vector.load %arg5[%c0_10, %c0_11] : memref<1x128xf32, #tpu.memory_space<vmem>>, vector<1x128xf32>
    %27 = vector.broadcast %26 : vector<1x128xf32> to vector<128x128xf32>
    %28 = arith.addf %25, %27 : vector<128x128xf32>
    %cst_12 = arith.constant 0.000000e+00 : f32
    %29 = vector.broadcast %cst_12 : f32 to vector<128x128xf32>
    %30 = arith.maximumf %28, %29 : vector<128x128xf32>
    %31 = arith.truncf %30 : vector<128x128xf32> to vector<128x128xbf16>
    %c0_13 = arith.constant 0 : index
    %c0_14 = arith.constant 0 : index
    %32 = vector.load %arg6[%c0_13, %c0_14] : memref<128x128xbf16, #tpu.memory_space<vmem>>, vector<128x128xbf16>
    %cst_15 = arith.constant dense<0.000000e+00> : vector<128x128xf32>
    %33 = tpu.matmul %31, %32, %cst_15 {dimension_numbers = #tpu.dot_dimension_numbers<[1], [0], [0], [1], [0, 0, 1, 1], [], []>} : vector<128x128xbf16>, vector<128x128xbf16>, vector<128x128xf32> -> vector<128x128xf32>
    %c0_16 = arith.constant 0 : index
    %c0_17 = arith.constant 0 : index
    %34 = vector.load %arg7[%c0_16, %c0_17] : memref<1x128xf32, #tpu.memory_space<vmem>>, vector<1x128xf32>
    %35 = vector.broadcast %34 : vector<1x128xf32> to vector<128x128xf32>
    %36 = arith.addf %33, %35 : vector<128x128xf32>
    %cst_18 = arith.constant 0.000000e+00 : f32
    %37 = vector.broadcast %cst_18 : f32 to vector<128x128xf32>
    %38 = arith.maximumf %36, %37 : vector<128x128xf32>
    %c0_19 = arith.constant 0 : index
    %c0_20 = arith.constant 0 : index
    %39 = vector.load %arg8[%c0_19, %c0_20] : memref<1x128xf32, #tpu.memory_space<vmem>>, vector<1x128xf32>
    %40 = vector.broadcast %39 : vector<1x128xf32> to vector<128x128xf32>
    %41 = arith.mulf %38, %40 : vector<128x128xf32>
    %cst_21 = arith.constant dense<0.000000e+00> : vector<128xf32>
    %42 = vector.multi_reduction <add>, %41, %cst_21 [1] : vector<128x128xf32> to vector<128xf32>
    %43 = vector.shape_cast %42 : vector<128xf32> to vector<128x1xf32>
    %c0_22 = arith.constant 0 : index
    %44 = memref.load %arg9[%c0_22] : memref<1xf32, #tpu.memory_space<smem>>
    %45 = vector.broadcast %44 : f32 to vector<128x1xf32>
    %46 = arith.addf %43, %45 : vector<128x1xf32>
    %c0_23 = arith.constant 0 : index
    %c0_24 = arith.constant 0 : index
    %47 = vector.load %arg10[%c0_23, %c0_24] : memref<128x1xf32, #tpu.memory_space<vmem>>, vector<128x1xf32>
    tpu.vector_store %arg10[%c0_23, %c0_24], %46 {strides = array<i32>} : memref<128x1xf32, #tpu.memory_space<vmem>>, vector<128x1xf32>,
    return
  }
  func.func @transform_0(%arg0: i32) -> (i32, i32) {
    %c0_i32 = arith.constant 0 : i32
    %c0_i32_0 = arith.constant 0 : i32
    return %arg0, %c0_i32 : i32, i32
  }
  func.func @transform_1(%arg0: i32) -> (i32, i32) {
    %c0_i32 = arith.constant 0 : i32
    %c0_i32_0 = arith.constant 0 : i32
    %c0_i32_1 = arith.constant 0 : i32
    return %c0_i32, %c0_i32_0 : i32, i32
  }
  func.func @transform_2(%arg0: i32) -> (i32, i32) {
    %c0_i32 = arith.constant 0 : i32
    %c0_i32_0 = arith.constant 0 : i32
    %c0_i32_1 = arith.constant 0 : i32
    return %c0_i32, %c0_i32_0 : i32, i32
  }
  func.func @transform_3(%arg0: i32) -> (i32, i32) {
    %c0_i32 = arith.constant 0 : i32
    %c0_i32_0 = arith.constant 0 : i32
    %c0_i32_1 = arith.constant 0 : i32
    return %c0_i32, %c0_i32_0 : i32, i32
  }
  func.func @transform_4(%arg0: i32) -> (i32, i32) {
    %c0_i32 = arith.constant 0 : i32
    %c0_i32_0 = arith.constant 0 : i32
    %c0_i32_1 = arith.constant 0 : i32
    return %c0_i32, %c0_i32_0 : i32, i32
  }
  func.func @transform_5(%arg0: i32) -> (i32, i32) {
    %c0_i32 = arith.constant 0 : i32
    %c0_i32_0 = arith.constant 0 : i32
    %c0_i32_1 = arith.constant 0 : i32
    return %c0_i32, %c0_i32_0 : i32, i32
  }
  func.func @transform_6(%arg0: i32) -> (i32, i32) {
    %c0_i32 = arith.constant 0 : i32
    %c0_i32_0 = arith.constant 0 : i32
    %c0_i32_1 = arith.constant 0 : i32
    return %c0_i32, %c0_i32_0 : i32, i32
  }
  func.func @transform_7(%arg0: i32) -> (i32, i32) {
    %c0_i32 = arith.constant 0 : i32
    %c0_i32_0 = arith.constant 0 : i32
    %c0_i32_1 = arith.constant 0 : i32
    return %c0_i32, %c0_i32_0 : i32, i32
  }
  func.func @transform_8(%arg0: i32) -> i32 {
    %c0_i32 = arith.constant 0 : i32
    %c0_i32_0 = arith.constant 0 : i32
    return %c0_i32 : i32
  }
  func.func @transform_9(%arg0: i32) -> (i32, i32) {
    %c0_i32 = arith.constant 0 : i32
    %c0_i32_0 = arith.constant 0 : i32
    return %arg0, %c0_i32 : i32, i32
  }
}

</mosaic_0001>

<llo_original>
// kernel: tpu_custom_call.1
$region0: #{tpu_custom_call.1}
  #allocation0 [shape = 'u32[]', space=smem, size = 0x4, offset = 0x4, fixed_abs, tag = 'smem constant byte address 0x4 - core index']
  #allocation1 [shape = 'u32[144,128]{1,0:T(1,128)}', space=vmem, size = 0x12000, scoped, tag = 'internal scratch']
  #allocation2 [shape = 'f32[1]{0:T(128)S(6)}', space=smem, size = 0x200, scoped, tag = 'scoped memory for tpu_custom_call.1']
  %s0 = inlined_call_operand.vmem [shape: f32[128,3], index: 0, kind: input, shape index: {}]
  %s1 = inlined_call_operand.vmem [shape: f32[3,128], index: 1, kind: input, shape index: {}]
  %s2 = inlined_call_operand.vmem [shape: f32[1,128], index: 2, kind: input, shape index: {}]
  %s3 = inlined_call_operand.vmem [shape: bf16[128,128], index: 3, kind: input, shape index: {}]
  %s4 = inlined_call_operand.vmem [shape: f32[1,128], index: 4, kind: input, shape index: {}]
  %s5 = inlined_call_operand.vmem [shape: bf16[128,128], index: 5, kind: input, shape index: {}]
  %s6 = inlined_call_operand.vmem [shape: f32[1,128], index: 6, kind: input, shape index: {}]
  %s7 = inlined_call_operand.vmem [shape: f32[1,128], index: 7, kind: input, shape index: {}]
  %s8 = inlined_call_operand.<no memory space> [shape: f32[1], index: 8, kind: input, shape index: {}]
  %s9 = inlined_call_operand.vmem [shape: f32[128,1], index: 9, kind: output, shape index: {}]
  %s10 = sld [smem:[#allocation0]]
  $region46: #{tpu_custom_call.1} parent=0
    _
  %s12 = ssub.s32 1, %s10
  %s13 = scalar_select 0, %s12, %s10
  %14 = sst [smem:[#allocation2]] %s8
  // Predicated region
  $region2: #{tpu_custom_call.1} parent=0 // pred_check
    _
  $region3: #{tpu_custom_call.1} parent=0 // pred_check_branch
    %16 = sbr.rel (0) target = $region5
  $region4: #{tpu_custom_call.1} parent=0 // pred_region
    _
  $region5: #{tpu_custom_call.1} parent=0 // pred_fallthru
    _
  // Predicated region
  $region6: #{tpu_custom_call.1} parent=0 // pred_check
    _
  $region7: #{tpu_custom_call.1} parent=0 // pred_check_branch
    %18 = sbr.rel (0) target = $region9
  $region8: #{tpu_custom_call.1} parent=0 // pred_region
    _
  $region9: #{tpu_custom_call.1} parent=0 // pred_fallthru
    _
  // Predicated region
  $region10: #{tpu_custom_call.1} parent=0 // pred_check
    _
  $region11: #{tpu_custom_call.1} parent=0 // pred_check_branch
    %20 = sbr.rel (0) target = $region13
  $region12: #{tpu_custom_call.1} parent=0 // pred_region
    _
  $region13: #{tpu_custom_call.1} parent=0 // pred_fallthru
    _
  // Predicated region
  $region14: #{tpu_custom_call.1} parent=0 // pred_check
    _
  $region15: #{tpu_custom_call.1} parent=0 // pred_check_branch
    %22 = sbr.rel (0) target = $region17
  $region16: #{tpu_custom_call.1} parent=0 // pred_region
    _
  $region17: #{tpu_custom_call.1} parent=0 // pred_fallthru
    _
  // Predicated region
  $region18: #{tpu_custom_call.1} parent=0 // pred_check
    _
  $region19: #{tpu_custom_call.1} parent=0 // pred_check_branch
    %24 = sbr.rel (0) target = $region21
  $region20: #{tpu_custom_call.1} parent=0 // pred_region
    _
  $region21: #{tpu_custom_call.1} parent=0 // pred_fallthru
    _
  // Predicated region
  $region22: #{tpu_custom_call.1} parent=0 // pred_check
    _
  $region23: #{tpu_custom_call.1} parent=0 // pred_check_branch
    %26 = sbr.rel (0) target = $region25
  $region24: #{tpu_custom_call.1} parent=0 // pred_region
    _
  $region25: #{tpu_custom_call.1} parent=0 // pred_fallthru
    _
  // Predicated region
  $region26: #{tpu_custom_call.1} parent=0 // pred_check
    _
  $region27: #{tpu_custom_call.1} parent=0 // pred_check_branch
    %28 = sbr.rel (0) target = $region29
  $region28: #{tpu_custom_call.1} parent=0 // pred_region
    _
  $region29: #{tpu_custom_call.1} parent=0 // pred_fallthru
    _
  // Predicated region
  $region30: #{tpu_custom_call.1} parent=0 // pred_check
    _
  $region31: #{tpu_custom_call.1} parent=0 // pred_check_branch
    %30 = sbr.rel (0) target = $region33
  $region32: #{tpu_custom_call.1} parent=0 // pred_region
    _
  $region33: #{tpu_custom_call.1} parent=0 // pred_fallthru
    _
  // Predicated region
  $region34: #{tpu_custom_call.1} parent=0 // pred_check
    _
  $region35: #{tpu_custom_call.1} parent=0 // pred_check_branch
    %32 = sbr.rel (0) target = $region37
  $region36: #{tpu_custom_call.1} parent=0 // pred_region
    _
  $region37: #{tpu_custom_call.1} parent=0 // pred_fallthru
    _
  %v34 = vld [vmem:[%s0] sm:$0xff]
  %v35 = vld [vmem:[%s0 + $0x8] sm:$0xff]
  %v36 = vld [vmem:[%s0 + $0x10] sm:$0xff]
  %v37 = vld [vmem:[%s0 + $0x18] sm:$0xff]
  %v38 = vld [vmem:[%s0 + $0x20] sm:$0xff]
  %v39 = vld [vmem:[%s0 + $0x28] sm:$0xff]
  %v40 = vld [vmem:[%s0 + $0x30] sm:$0xff]
  %v41 = vld [vmem:[%s0 + $0x38] sm:$0xff]
  %v42 = vld [vmem:[%s0 + $0x40] sm:$0xff]
  %v43 = vld [vmem:[%s0 + $0x48] sm:$0xff]
  %v44 = vld [vmem:[%s0 + $0x50] sm:$0xff]
  %v45 = vld [vmem:[%s0 + $0x58] sm:$0xff]
  %v46 = vld [vmem:[%s0 + $0x60] sm:$0xff]
  %v47 = vld [vmem:[%s0 + $0x68] sm:$0xff]
  %v48 = vld [vmem:[%s0 + $0x70] sm:$0xff]
  %v49 = vld [vmem:[%s0 + $0x78] sm:$0xff]
  %v50 = vld [vmem:[%s1] sm:$0x1]
  %52 = vset.pattern.permute.xlu0 0
  %53 = vperm.xlu0 %52, %v34
  %v54 = vpop.permute.xlu0 %53
  %57 = vset.pattern.permute.xlu0 0
  %58 = vperm.xlu0 %57, %v35
  %v59 = vpop.permute.xlu0 %58
  %62 = vset.pattern.permute.xlu0 0
  %63 = vperm.xlu0 %62, %v36
  %v64 = vpop.permute.xlu0 %63
  %67 = vset.pattern.permute.xlu0 0
  %68 = vperm.xlu0 %67, %v37
  %v69 = vpop.permute.xlu0 %68
  %72 = vset.pattern.permute.xlu0 0
  %73 = vperm.xlu0 %72, %v38
  %v74 = vpop.permute.xlu0 %73
  %77 = vset.pattern.permute.xlu0 0
  %78 = vperm.xlu0 %77, %v39
  %v79 = vpop.permute.xlu0 %78
  %82 = vset.pattern.permute.xlu0 0
  %83 = vperm.xlu0 %82, %v40
  %v84 = vpop.permute.xlu0 %83
  %87 = vset.pattern.permute.xlu0 0
  %88 = vperm.xlu0 %87, %v41
  %v89 = vpop.permute.xlu0 %88
  %92 = vset.pattern.permute.xlu0 0
  %93 = vperm.xlu0 %92, %v42
  %v94 = vpop.permute.xlu0 %93
  %97 = vset.pattern.permute.xlu0 0
  %98 = vperm.xlu0 %97, %v43
  %v99 = vpop.permute.xlu0 %98
  %102 = vset.pattern.permute.xlu0 0
  %103 = vperm.xlu0 %102, %v44
  %v104 = vpop.permute.xlu0 %103
  %107 = vset.pattern.permute.xlu0 0
  %108 = vperm.xlu0 %107, %v45
  %v109 = vpop.permute.xlu0 %108
  %112 = vset.pattern.permute.xlu0 0
  %113 = vperm.xlu0 %112, %v46
  %v114 = vpop.permute.xlu0 %113
  %117 = vset.pattern.permute.xlu0 0
  %118 = vperm.xlu0 %117, %v47
  %v119 = vpop.permute.xlu0 %118
  %122 = vset.pattern.permute.xlu0 0
  %123 = vperm.xlu0 %122, %v48
  %v124 = vpop.permute.xlu0 %123
  %127 = vset.pattern.permute.xlu0 0
  %128 = vperm.xlu0 %127, %v49
  %v129 = vpop.permute.xlu0 %128
  %v131 = vlaneseq
  %v132 = vshrl.u32 %v131, 7
  %v133 = vsub.s32 0, %v132
  %v134 = vrot.slane %v50, %v133
  %v135 = vmul.f32 %v54, %v134
  %v136 = vmul.f32 %v59, %v134
  %v137 = vmul.f32 %v64, %v134
  %v138 = vmul.f32 %v69, %v134
  %v139 = vmul.f32 %v74, %v134
  %v140 = vmul.f32 %v79, %v134
  %v141 = vmul.f32 %v84, %v134
  %v142 = vmul.f32 %v89, %v134
  %v143 = vmul.f32 %v94, %v134
  %v144 = vmul.f32 %v99, %v134
  %v145 = vmul.f32 %v104, %v134
  %v146 = vmul.f32 %v109, %v134
  %v147 = vmul.f32 %v114, %v134
  %v148 = vmul.f32 %v119, %v134
  %v149 = vmul.f32 %v124, %v134
  %v150 = vmul.f32 %v129, %v134
  %v151 = vld [vmem:[%s1 + $0x1] sm:$0x1]
  %152 = vset.pattern.permute.xlu0 1
  %153 = vperm.xlu0 %152, %v34
  %v154 = vpop.permute.xlu0 %153
  %156 = vset.pattern.permute.xlu0 1
  %157 = vperm.xlu0 %156, %v35
  %v158 = vpop.permute.xlu0 %157
  %160 = vset.pattern.permute.xlu0 1
  %161 = vperm.xlu0 %160, %v36
  %v162 = vpop.permute.xlu0 %161
  %164 = vset.pattern.permute.xlu0 1
  %165 = vperm.xlu0 %164, %v37
  %v166 = vpop.permute.xlu0 %165
  %168 = vset.pattern.permute.xlu0 1
  %169 = vperm.xlu0 %168, %v38
  %v170 = vpop.permute.xlu0 %169
  %172 = vset.pattern.permute.xlu0 1
  %173 = vperm.xlu0 %172, %v39
  %v174 = vpop.permute.xlu0 %173
  %176 = vset.pattern.permute.xlu0 1
  %177 = vperm.xlu0 %176, %v40
  %v178 = vpop.permute.xlu0 %177
  %180 = vset.pattern.permute.xlu0 1
  %181 = vperm.xlu0 %180, %v41
  %v182 = vpop.permute.xlu0 %181
  %184 = vset.pattern.permute.xlu0 1
  %185 = vperm.xlu0 %184, %v42
  %v186 = vpop.permute.xlu0 %185
  %188 = vset.pattern.permute.xlu0 1
  %189 = vperm.xlu0 %188, %v43
  %v190 = vpop.permute.xlu0 %189
  %192 = vset.pattern.permute.xlu0 1
  %193 = vperm.xlu0 %192, %v44
  %v194 = vpop.permute.xlu0 %193
  %196 = vset.pattern.permute.xlu0 1
  %197 = vperm.xlu0 %196, %v45
  %v198 = vpop.permute.xlu0 %197
  %200 = vset.pattern.permute.xlu0 1
  %201 = vperm.xlu0 %200, %v46
  %v202 = vpop.permute.xlu0 %201
  %204 = vset.pattern.permute.xlu0 1
  %205 = vperm.xlu0 %204, %v47
  %v206 = vpop.permute.xlu0 %205
  %208 = vset.pattern.permute.xlu0 1
  %209 = vperm.xlu0 %208, %v48
  %v210 = vpop.permute.xlu0 %209
  %212 = vset.pattern.permute.xlu0 1
  %213 = vperm.xlu0 %212, %v49
  %v214 = vpop.permute.xlu0 %213
  %v216 = vlaneseq
  %v217 = vshrl.u32 %v216, 7
  %v218 = vsub.s32 0, %v217
  %v219 = vrot.slane %v151, %v218
  %v220 = vmul.f32 %v154, %v219
  %v221 = vmul.f32 %v158, %v219
  %v222 = vmul.f32 %v162, %v219
  %v223 = vmul.f32 %v166, %v219
  %v224 = vmul.f32 %v170, %v219
  %v225 = vmul.f32 %v174, %v219
  %v226 = vmul.f32 %v178, %v219
  %v227 = vmul.f32 %v182, %v219
  %v228 = vmul.f32 %v186, %v219
  %v229 = vmul.f32 %v190, %v219
  %v230 = vmul.f32 %v194, %v219
  %v231 = vmul.f32 %v198, %v219
  %v232 = vmul.f32 %v202, %v219
  %v233 = vmul.f32 %v206, %v219
  %v234 = vmul.f32 %v210, %v219
  %v235 = vmul.f32 %v214, %v219
  %v236 = vadd.f32 %v135, %v220
  %v237 = vadd.f32 %v136, %v221
  %v238 = vadd.f32 %v137, %v222
  %v239 = vadd.f32 %v138, %v223
  %v240 = vadd.f32 %v139, %v224
  %v241 = vadd.f32 %v140, %v225
  %v242 = vadd.f32 %v141, %v226
  %v243 = vadd.f32 %v142, %v227
  %v244 = vadd.f32 %v143, %v228
  %v245 = vadd.f32 %v144, %v229
  %v246 = vadd.f32 %v145, %v230
  %v247 = vadd.f32 %v146, %v231
  %v248 = vadd.f32 %v147, %v232
  %v249 = vadd.f32 %v148, %v233
  %v250 = vadd.f32 %v149, %v234
  %v251 = vadd.f32 %v150, %v235
  %v252 = vld [vmem:[%s1 + $0x2] sm:$0x1]
  %253 = vset.pattern.permute.xlu0 2
  %254 = vperm.xlu0 %253, %v34
  %v255 = vpop.permute.xlu0 %254
  %257 = vset.pattern.permute.xlu0 2
  %258 = vperm.xlu0 %257, %v35
  %v259 = vpop.permute.xlu0 %258
  %261 = vset.pattern.permute.xlu0 2
  %262 = vperm.xlu0 %261, %v36
  %v263 = vpop.permute.xlu0 %262
  %265 = vset.pattern.permute.xlu0 2
  %266 = vperm.xlu0 %265, %v37
  %v267 = vpop.permute.xlu0 %266
  %269 = vset.pattern.permute.xlu0 2
  %270 = vperm.xlu0 %269, %v38
  %v271 = vpop.permute.xlu0 %270
  %273 = vset.pattern.permute.xlu0 2
  %274 = vperm.xlu0 %273, %v39
  %v275 = vpop.permute.xlu0 %274
  %277 = vset.pattern.permute.xlu0 2
  %278 = vperm.xlu0 %277, %v40
  %v279 = vpop.permute.xlu0 %278
  %281 = vset.pattern.permute.xlu0 2
  %282 = vperm.xlu0 %281, %v41
  %v283 = vpop.permute.xlu0 %282
  %285 = vset.pattern.permute.xlu0 2
  %286 = vperm.xlu0 %285, %v42
  %v287 = vpop.permute.xlu0 %286
  %289 = vset.pattern.permute.xlu0 2
  %290 = vperm.xlu0 %289, %v43
  %v291 = vpop.permute.xlu0 %290
  %293 = vset.pattern.permute.xlu0 2
  %294 = vperm.xlu0 %293, %v44
  %v295 = vpop.permute.xlu0 %294
  %297 = vset.pattern.permute.xlu0 2
  %298 = vperm.xlu0 %297, %v45
  %v299 = vpop.permute.xlu0 %298
  %301 = vset.pattern.permute.xlu0 2
  %302 = vperm.xlu0 %301, %v46
  %v303 = vpop.permute.xlu0 %302
  %305 = vset.pattern.permute.xlu0 2
  %306 = vperm.xlu0 %305, %v47
  %v307 = vpop.permute.xlu0 %306
  %309 = vset.pattern.permute.xlu0 2
  %310 = vperm.xlu0 %309, %v48
  %v311 = vpop.permute.xlu0 %310
  %313 = vset.pattern.permute.xlu0 2
  %314 = vperm.xlu0 %313, %v49
  %v315 = vpop.permute.xlu0 %314
  %v317 = vlaneseq
  %v318 = vshrl.u32 %v317, 7
  %v319 = vsub.s32 0, %v318
  %v320 = vrot.slane %v252, %v319
  %v321 = vmul.f32 %v255, %v320
  %v322 = vmul.f32 %v259, %v320
  %v323 = vmul.f32 %v263, %v320
  %v324 = vmul.f32 %v267, %v320
  %v325 = vmul.f32 %v271, %v320
  %v326 = vmul.f32 %v275, %v320
  %v327 = vmul.f32 %v279, %v320
  %v328 = vmul.f32 %v283, %v320
  %v329 = vmul.f32 %v287, %v320
  %v330 = vmul.f32 %v291, %v320
  %v331 = vmul.f32 %v295, %v320
  %v332 = vmul.f32 %v299, %v320
  %v333 = vmul.f32 %v303, %v320
  %v334 = vmul.f32 %v307, %v320
  %v335 = vmul.f32 %v311, %v320
  %v336 = vmul.f32 %v315, %v320
  %v337 = vadd.f32 %v236, %v321
  %v338 = vadd.f32 %v237, %v322
  %v339 = vadd.f32 %v238, %v323
  %v340 = vadd.f32 %v239, %v324
  %v341 = vadd.f32 %v240, %v325
  %v342 = vadd.f32 %v241, %v326
  %v343 = vadd.f32 %v242, %v327
  %v344 = vadd.f32 %v243, %v328
  %v345 = vadd.f32 %v244, %v329
  %v346 = vadd.f32 %v245, %v330
  %v347 = vadd.f32 %v246, %v331
  %v348 = vadd.f32 %v247, %v332
  %v349 = vadd.f32 %v248, %v333
  %v350 = vadd.f32 %v249, %v334
  %v351 = vadd.f32 %v250, %v335
  %v352 = vadd.f32 %v251, %v336
  %v353 = vld [vmem:[%s2] sm:$0x1]
  %v355 = vlaneseq
  %v356 = vshrl.u32 %v355, 7
  %v357 = vsub.s32 0, %v356
  %v358 = vrot.slane %v353, %v357
  %v360 = vadd.f32 %v337, %v358
  %v361 = vadd.f32 %v338, %v358
  %v362 = vadd.f32 %v339, %v358
  %v363 = vadd.f32 %v340, %v358
  %v364 = vadd.f32 %v341, %v358
  %v365 = vadd.f32 %v342, %v358
  %v366 = vadd.f32 %v343, %v358
  %v367 = vadd.f32 %v344, %v358
  %v368 = vadd.f32 %v345, %v358
  %v369 = vadd.f32 %v346, %v358
  %v370 = vadd.f32 %v347, %v358
  %v371 = vadd.f32 %v348, %v358
  %v372 = vadd.f32 %v349, %v358
  %v373 = vadd.f32 %v350, %v358
  %v374 = vadd.f32 %v351, %v358
  %v375 = vadd.f32 %v352, %v358
  %v376 = vmax.f32 %v360, 0.0
  %v377 = vmax.f32 %v361, 0.0
  %v378 = vmax.f32 %v362, 0.0
  %v379 = vmax.f32 %v363, 0.0
  %v380 = vmax.f32 %v364, 0.0
  %v381 = vmax.f32 %v365, 0.0
  %v382 = vmax.f32 %v366, 0.0
  %v383 = vmax.f32 %v367, 0.0
  %v384 = vmax.f32 %v368, 0.0
  %v385 = vmax.f32 %v369, 0.0
  %v386 = vmax.f32 %v370, 0.0
  %v387 = vmax.f32 %v371, 0.0
  %v388 = vmax.f32 %v372, 0.0
  %v389 = vmax.f32 %v373, 0.0
  %v390 = vmax.f32 %v374, 0.0
  %v391 = vmax.f32 %v375, 0.0
  %v392 = vpack.c.bf16 %v377, %v376
  %v393 = vpack.c.bf16 %v379, %v378
  %v394 = vpack.c.bf16 %v381, %v380
  %v395 = vpack.c.bf16 %v383, %v382
  %v396 = vpack.c.bf16 %v385, %v384
  %v397 = vpack.c.bf16 %v387, %v386
  %v398 = vpack.c.bf16 %v389, %v388
  %v399 = vpack.c.bf16 %v391, %v390
  %v400 = vld [vmem:[%s3] sm:$0xf]
  %v401 = vld [vmem:[%s3 + $0x4] sm:$0xf]
  %v402 = vld [vmem:[%s3 + $0x8] sm:$0xf]
  %v403 = vld [vmem:[%s3 + $0xc] sm:$0xf]
  %v404 = vld [vmem:[%s3 + $0x10] sm:$0xf]
  %v405 = vld [vmem:[%s3 + $0x14] sm:$0xf]
  %v406 = vld [vmem:[%s3 + $0x18] sm:$0xf]
  %v407 = vld [vmem:[%s3 + $0x1c] sm:$0xf]
  %v408 = vld [vmem:[%s3 + $0x20] sm:$0xf]
  %v409 = vld [vmem:[%s3 + $0x24] sm:$0xf]
  %v410 = vld [vmem:[%s3 + $0x28] sm:$0xf]
  %v411 = vld [vmem:[%s3 + $0x2c] sm:$0xf]
  %v412 = vld [vmem:[%s3 + $0x30] sm:$0xf]
  %v413 = vld [vmem:[%s3 + $0x34] sm:$0xf]
  %v414 = vld [vmem:[%s3 + $0x38] sm:$0xf]
  %v415 = vld [vmem:[%s3 + $0x3c] sm:$0xf]
  %v416 = vld [vmem:[%s4] sm:$0x1]
  %v418 = vlaneseq
  %v419 = vshrl.u32 %v418, 7
  %v420 = vsub.s32 0, %v419
  %v421 = vrot.slane %v416, %v420
  %v439 = vunpack.c.l.b16 %v400
  %v440 = vunpack.c.l.b16 %v401
  %v441 = vunpack.c.l.b16 %v402
  %v442 = vunpack.c.l.b16 %v403
  %v443 = vunpack.c.l.b16 %v404
  %v444 = vunpack.c.l.b16 %v405
  %v445 = vunpack.c.l.b16 %v406
  %v446 = vunpack.c.l.b16 %v407
  %v447 = vunpack.c.l.b16 %v408
  %v448 = vunpack.c.l.b16 %v409
  %v449 = vunpack.c.l.b16 %v410
  %v450 = vunpack.c.l.b16 %v411
  %v451 = vunpack.c.l.b16 %v412
  %v452 = vunpack.c.l.b16 %v413
  %v453 = vunpack.c.l.b16 %v414
  %v454 = vunpack.c.l.b16 %v415
  %v455 = vpack.c.b16 %v440, %v439
  %v456 = vpack.c.b16 %v442, %v441
  %v457 = vpack.c.b16 %v444, %v443
  %v458 = vpack.c.b16 %v446, %v445
  %v459 = vpack.c.b16 %v448, %v447
  %v460 = vpack.c.b16 %v450, %v449
  %v461 = vpack.c.b16 %v452, %v451
  %v462 = vpack.c.b16 %v454, %v453
  %471 = vmatprep.subr.bf16.mxu0 0
  %472 = vmatpush1.bf16.msra.mxu0 %v462
  %473 = vmatprep.subr.bf16.mxu0 0
  %474 = vmatpush1.bf16.msra.mxu0 %v461
  %475 = vmatprep.subr.bf16.mxu0 0
  %476 = vmatpush1.bf16.msra.mxu0 %v460
  %477 = vmatprep.subr.bf16.mxu0 0
  %478 = vmatpush1.bf16.msra.mxu0 %v459
  %479 = vmatprep.subr.bf16.mxu0 0
  %480 = vmatpush1.bf16.msra.mxu0 %v458
  %481 = vmatprep.subr.bf16.mxu0 0
  %482 = vmatpush1.bf16.msra.mxu0 %v457
  %483 = vmatprep.subr.bf16.mxu0 0
  %484 = vmatpush1.bf16.msra.mxu0 %v456
  %485 = vmatprep.subr.bf16.mxu0 0
  %486 = vmatpush1.bf16.msra.mxu0 %v455
  %487 = vmatprep.subr.bf16.mxu0 0
  %488 = vmatpush2.bf16.msra.mxu0 0
  %489 = vmatprep.subr.bf16.mxu0 0
  %490 = vmatpush2.bf16.msra.mxu0 0
  %491 = vmatprep.subr.bf16.mxu0 0
  %492 = vmatpush2.bf16.msra.mxu0 0
  %493 = vmatprep.subr.bf16.mxu0 0
  %494 = vmatpush2.bf16.msra.mxu0 0
  %495 = vmatprep.subr.bf16.mxu0 0
  %496 = vmatpush2.bf16.msra.mxu0 0
  %497 = vmatprep.subr.bf16.mxu0 0
  %498 = vmatpush2.bf16.msra.mxu0 0
  %499 = vmatprep.subr.bf16.mxu0 0
  %500 = vmatpush2.bf16.msra.mxu0 0
  %501 = vmatprep.subr.bf16.mxu0 0
  %502 = vmatpush2.bf16.msra.mxu0 0
  %503 = vmatprep.mubr.bf16.mxu0 0
  %504 = vmatmul.mubr.bf16.gmra.mxu0 %v392
  %v505 = vpop.f32.mrf.mxu0
  %v506 = vadd.f32 %v421, %v505
  %v507 = vpop.f32.mrf.mxu0
  %v508 = vpop.f32.mrf.mxu0
  %v509 = vadd.f32 %v421, %v508
  %v510 = vpop.f32.mrf.mxu0
  %511 = vmatprep.mubr.bf16.mxu0 0
  %512 = vmatmul.mubr.bf16.gmra.mxu0 %v393
  %v513 = vpop.f32.mrf.mxu0
  %v514 = vadd.f32 %v421, %v513
  %v515 = vpop.f32.mrf.mxu0
  %v516 = vpop.f32.mrf.mxu0
  %v517 = vadd.f32 %v421, %v516
  %v518 = vpop.f32.mrf.mxu0
  %519 = vmatprep.mubr.bf16.mxu0 0
  %520 = vmatmul.mubr.bf16.gmra.mxu0 %v394
  %v521 = vpop.f32.mrf.mxu0
  %v522 = vadd.f32 %v421, %v521
  %v523 = vpop.f32.mrf.mxu0
  %v524 = vpop.f32.mrf.mxu0
  %v525 = vadd.f32 %v421, %v524
  %v526 = vpop.f32.mrf.mxu0
  %527 = vmatprep.mubr.bf16.mxu0 0
  %528 = vmatmul.mubr.bf16.gmra.mxu0 %v395
  %v529 = vpop.f32.mrf.mxu0
  %v530 = vadd.f32 %v421, %v529
  %v531 = vpop.f32.mrf.mxu0
  %v532 = vpop.f32.mrf.mxu0
  %v533 = vadd.f32 %v421, %v532
  %v534 = vpop.f32.mrf.mxu0
  %535 = vmatprep.mubr.bf16.mxu0 0
  %536 = vmatmul.mubr.bf16.gmra.mxu0 %v396
  %v537 = vpop.f32.mrf.mxu0
  %v538 = vadd.f32 %v421, %v537
  %v539 = vpop.f32.mrf.mxu0
  %v540 = vpop.f32.mrf.mxu0
  %v541 = vadd.f32 %v421, %v540
  %v542 = vpop.f32.mrf.mxu0
  %543 = vmatprep.mubr.bf16.mxu0 0
  %544 = vmatmul.mubr.bf16.gmra.mxu0 %v397
  %v545 = vpop.f32.mrf.mxu0
  %v546 = vadd.f32 %v421, %v545
  %v547 = vpop.f32.mrf.mxu0
  %v548 = vpop.f32.mrf.mxu0
  %v549 = vadd.f32 %v421, %v548
  %v550 = vpop.f32.mrf.mxu0
  %551 = vmatprep.mubr.bf16.mxu0 0
  %552 = vmatmul.mubr.bf16.gmra.mxu0 %v398
  %v553 = vpop.f32.mrf.mxu0
  %v554 = vadd.f32 %v421, %v553
  %v555 = vpop.f32.mrf.mxu0
  %v556 = vpop.f32.mrf.mxu0
  %v557 = vadd.f32 %v421, %v556
  %v558 = vpop.f32.mrf.mxu0
  %559 = vmatprep.mubr.bf16.mxu0 0
  %560 = vmatmul.mubr.bf16.gmra.mxu0 %v399
  %v561 = vpop.f32.mrf.mxu0
  %v562 = vadd.f32 %v421, %v561
  %v563 = vpop.f32.mrf.mxu0
  %v564 = vpop.f32.mrf.mxu0
  %v565 = vadd.f32 %v421, %v564
  %v566 = vpop.f32.mrf.mxu0
  %567 = vdwg.mxu0
  %v568 = vmax.f32 %v506, 0.0
  %v569 = vmax.f32 %v509, 0.0
  %v570 = vmax.f32 %v514, 0.0
  %v571 = vmax.f32 %v517, 0.0
  %v572 = vmax.f32 %v522, 0.0
  %v573 = vmax.f32 %v525, 0.0
  %v574 = vmax.f32 %v530, 0.0
  %v575 = vmax.f32 %v533, 0.0
  %v576 = vmax.f32 %v538, 0.0
  %v577 = vmax.f32 %v541, 0.0
  %v578 = vmax.f32 %v546, 0.0
  %v579 = vmax.f32 %v549, 0.0
  %v580 = vmax.f32 %v554, 0.0
  %v581 = vmax.f32 %v557, 0.0
  %v582 = vmax.f32 %v562, 0.0
  %v583 = vmax.f32 %v565, 0.0
  %v584 = vpack.c.bf16 %v569, %v568
  %v585 = vpack.c.bf16 %v571, %v570
  %v586 = vpack.c.bf16 %v573, %v572
  %v587 = vpack.c.bf16 %v575, %v574
  %v588 = vpack.c.bf16 %v577, %v576
  %v589 = vpack.c.bf16 %v579, %v578
  %v590 = vpack.c.bf16 %v581, %v580
  %v591 = vpack.c.bf16 %v583, %v582
  %v592 = vld [vmem:[%s5] sm:$0xf]
  %v593 = vld [vmem:[%s5 + $0x4] sm:$0xf]
  %v594 = vld [vmem:[%s5 + $0x8] sm:$0xf]
  %v595 = vld [vmem:[%s5 + $0xc] sm:$0xf]
  %v596 = vld [vmem:[%s5 + $0x10] sm:$0xf]
  %v597 = vld [vmem:[%s5 + $0x14] sm:$0xf]
  %v598 = vld [vmem:[%s5 + $0x18] sm:$0xf]
  %v599 = vld [vmem:[%s5 + $0x1c] sm:$0xf]
  %v600 = vld [vmem:[%s5 + $0x20] sm:$0xf]
  %v601 = vld [vmem:[%s5 + $0x24] sm:$0xf]
  %v602 = vld [vmem:[%s5 + $0x28] sm:$0xf]
  %v603 = vld [vmem:[%s5 + $0x2c] sm:$0xf]
  %v604 = vld [vmem:[%s5 + $0x30] sm:$0xf]
  %v605 = vld [vmem:[%s5 + $0x34] sm:$0xf]
  %v606 = vld [vmem:[%s5 + $0x38] sm:$0xf]
  %v607 = vld [vmem:[%s5 + $0x3c] sm:$0xf]
  %v608 = vld [vmem:[%s6] sm:$0x1]
  %v610 = vlaneseq
  %v611 = vshrl.u32 %v610, 7
  %v612 = vsub.s32 0, %v611
  %v613 = vrot.slane %v608, %v612
  %v631 = vunpack.c.l.b16 %v592
  %v632 = vunpack.c.l.b16 %v593
  %v633 = vunpack.c.l.b16 %v594
  %v634 = vunpack.c.l.b16 %v595
  %v635 = vunpack.c.l.b16 %v596
  %v636 = vunpack.c.l.b16 %v597
  %v637 = vunpack.c.l.b16 %v598
  %v638 = vunpack.c.l.b16 %v599
  %v639 = vunpack.c.l.b16 %v600
  %v640 = vunpack.c.l.b16 %v601
  %v641 = vunpack.c.l.b16 %v602
  %v642 = vunpack.c.l.b16 %v603
  %v643 = vunpack.c.l.b16 %v604
  %v644 = vunpack.c.l.b16 %v605
  %v645 = vunpack.c.l.b16 %v606
  %v646 = vunpack.c.l.b16 %v607
  %v647 = vpack.c.b16 %v632, %v631
  %v648 = vpack.c.b16 %v634, %v633
  %v649 = vpack.c.b16 %v636, %v635
  %v650 = vpack.c.b16 %v638, %v637
  %v651 = vpack.c.b16 %v640, %v639
  %v652 = vpack.c.b16 %v642, %v641
  %v653 = vpack.c.b16 %v644, %v643
  %v654 = vpack.c.b16 %v646, %v645
  %663 = vmatprep.subr.bf16.mxu0 0
  %664 = vmatpush1.bf16.msra.mxu0 %v654
  %665 = vmatprep.subr.bf16.mxu0 0
  %666 = vmatpush1.bf16.msra.mxu0 %v653
  %667 = vmatprep.subr.bf16.mxu0 0
  %668 = vmatpush1.bf16.msra.mxu0 %v652
  %669 = vmatprep.subr.bf16.mxu0 0
  %670 = vmatpush1.bf16.msra.mxu0 %v651
  %671 = vmatprep.subr.bf16.mxu0 0
  %672 = vmatpush1.bf16.msra.mxu0 %v650
  %673 = vmatprep.subr.bf16.mxu0 0
  %674 = vmatpush1.bf16.msra.mxu0 %v649
  %675 = vmatprep.subr.bf16.mxu0 0
  %676 = vmatpush1.bf16.msra.mxu0 %v648
  %677 = vmatprep.subr.bf16.mxu0 0
  %678 = vmatpush1.bf16.msra.mxu0 %v647
  %679 = vmatprep.subr.bf16.mxu0 0
  %680 = vmatpush2.bf16.msra.mxu0 0
  %681 = vmatprep.subr.bf16.mxu0 0
  %682 = vmatpush2.bf16.msra.mxu0 0
  %683 = vmatprep.subr.bf16.mxu0 0
  %684 = vmatpush2.bf16.msra.mxu0 0
  %685 = vmatprep.subr.bf16.mxu0 0
  %686 = vmatpush2.bf16.msra.mxu0 0
  %687 = vmatprep.subr.bf16.mxu0 0
  %688 = vmatpush2.bf16.msra.mxu0 0
  %689 = vmatprep.subr.bf16.mxu0 0
  %690 = vmatpush2.bf16.msra.mxu0 0
  %691 = vmatprep.subr.bf16.mxu0 0
  %692 = vmatpush2.bf16.msra.mxu0 0
  %693 = vmatprep.subr.bf16.mxu0 0
  %694 = vmatpush2.bf16.msra.mxu0 0
  %695 = vmatprep.mubr.bf16.mxu0 0
  %696 = vmatmul.mubr.bf16.gmra.mxu0 %v584
  %v697 = vpop.f32.mrf.mxu0
  %v698 = vadd.f32 %v613, %v697
  %v699 = vpop.f32.mrf.mxu0
  %v700 = vpop.f32.mrf.mxu0
  %v701 = vadd.f32 %v613, %v700
  %v702 = vpop.f32.mrf.mxu0
  %703 = vmatprep.mubr.bf16.mxu0 0
  %704 = vmatmul.mubr.bf16.gmra.mxu0 %v585
  %v705 = vpop.f32.mrf.mxu0
  %v706 = vadd.f32 %v613, %v705
  %v707 = vpop.f32.mrf.mxu0
  %v708 = vpop.f32.mrf.mxu0
  %v709 = vadd.f32 %v613, %v708
  %v710 = vpop.f32.mrf.mxu0
  %711 = vmatprep.mubr.bf16.mxu0 0
  %712 = vmatmul.mubr.bf16.gmra.mxu0 %v586
  %v713 = vpop.f32.mrf.mxu0
  %v714 = vadd.f32 %v613, %v713
  %v715 = vpop.f32.mrf.mxu0
  %v716 = vpop.f32.mrf.mxu0
  %v717 = vadd.f32 %v613, %v716
  %v718 = vpop.f32.mrf.mxu0
  %719 = vmatprep.mubr.bf16.mxu0 0
  %720 = vmatmul.mubr.bf16.gmra.mxu0 %v587
  %v721 = vpop.f32.mrf.mxu0
  %v722 = vadd.f32 %v613, %v721
  %v723 = vpop.f32.mrf.mxu0
  %v724 = vpop.f32.mrf.mxu0
  %v725 = vadd.f32 %v613, %v724
  %v726 = vpop.f32.mrf.mxu0
  %727 = vmatprep.mubr.bf16.mxu0 0
  %728 = vmatmul.mubr.bf16.gmra.mxu0 %v588
  %v729 = vpop.f32.mrf.mxu0
  %v730 = vadd.f32 %v613, %v729
  %v731 = vpop.f32.mrf.mxu0
  %v732 = vpop.f32.mrf.mxu0
  %v733 = vadd.f32 %v613, %v732
  %v734 = vpop.f32.mrf.mxu0
  %735 = vmatprep.mubr.bf16.mxu0 0
  %736 = vmatmul.mubr.bf16.gmra.mxu0 %v589
  %v737 = vpop.f32.mrf.mxu0
  %v738 = vadd.f32 %v613, %v737
  %v739 = vpop.f32.mrf.mxu0
  %v740 = vpop.f32.mrf.mxu0
  %v741 = vadd.f32 %v613, %v740
  %v742 = vpop.f32.mrf.mxu0
  %743 = vmatprep.mubr.bf16.mxu0 0
  %744 = vmatmul.mubr.bf16.gmra.mxu0 %v590
  %v745 = vpop.f32.mrf.mxu0
  %v746 = vadd.f32 %v613, %v745
  %v747 = vpop.f32.mrf.mxu0
  %v748 = vpop.f32.mrf.mxu0
  %v749 = vadd.f32 %v613, %v748
  %v750 = vpop.f32.mrf.mxu0
  %751 = vmatprep.mubr.bf16.mxu0 0
  %752 = vmatmul.mubr.bf16.gmra.mxu0 %v591
  %v753 = vpop.f32.mrf.mxu0
  %v754 = vadd.f32 %v613, %v753
  %v755 = vpop.f32.mrf.mxu0
  %v756 = vpop.f32.mrf.mxu0
  %v757 = vadd.f32 %v613, %v756
  %v758 = vpop.f32.mrf.mxu0
  %759 = vdwg.mxu0
  %v760 = vmax.f32 %v698, 0.0
  %v761 = vmax.f32 %v701, 0.0
  %v762 = vmax.f32 %v706, 0.0
  %v763 = vmax.f32 %v709, 0.0
  %v764 = vmax.f32 %v714, 0.0
  %v765 = vmax.f32 %v717, 0.0
  %v766 = vmax.f32 %v722, 0.0
  %v767 = vmax.f32 %v725, 0.0
  %v768 = vmax.f32 %v730, 0.0
  %v769 = vmax.f32 %v733, 0.0
  %v770 = vmax.f32 %v738, 0.0
  %v771 = vmax.f32 %v741, 0.0
  %v772 = vmax.f32 %v746, 0.0
  %v773 = vmax.f32 %v749, 0.0
  %v774 = vmax.f32 %v754, 0.0
  %v775 = vmax.f32 %v757, 0.0
  %v776 = vld [vmem:[%s7] sm:$0x1]
  %v778 = vlaneseq
  %v779 = vshrl.u32 %v778, 7
  %v780 = vsub.s32 0, %v779
  %v781 = vrot.slane %v776, %v780
  %v783 = vmul.f32 %v760, %v781
  %v784 = vmul.f32 %v761, %v781
  %v785 = vmul.f32 %v762, %v781
  %v786 = vmul.f32 %v763, %v781
  %v787 = vmul.f32 %v764, %v781
  %v788 = vmul.f32 %v765, %v781
  %v789 = vmul.f32 %v766, %v781
  %v790 = vmul.f32 %v767, %v781
  %v791 = vmul.f32 %v768, %v781
  %v792 = vmul.f32 %v769, %v781
  %v793 = vmul.f32 %v770, %v781
  %v794 = vmul.f32 %v771, %v781
  %v795 = vmul.f32 %v772, %v781
  %v796 = vmul.f32 %v773, %v781
  %v797 = vmul.f32 %v774, %v781
  %v798 = vmul.f32 %v775, %v781
  %799 = vadd.xlane.f32.xlu0 %v783
  %v800 = vpop.xlane.xlu0 %799
  %801 = vadd.xlane.f32.xlu0 %v784
  %v802 = vpop.xlane.xlu0 %801
  %803 = vadd.xlane.f32.xlu0 %v785
  %v804 = vpop.xlane.xlu0 %803
  %805 = vadd.xlane.f32.xlu0 %v786
  %v806 = vpop.xlane.xlu0 %805
  %807 = vadd.xlane.f32.xlu0 %v787
  %v808 = vpop.xlane.xlu0 %807
  %809 = vadd.xlane.f32.xlu0 %v788
  %v810 = vpop.xlane.xlu0 %809
  %811 = vadd.xlane.f32.xlu0 %v789
  %v812 = vpop.xlane.xlu0 %811
  %813 = vadd.xlane.f32.xlu0 %v790
  %v814 = vpop.xlane.xlu0 %813
  %815 = vadd.xlane.f32.xlu0 %v791
  %v816 = vpop.xlane.xlu0 %815
  %817 = vadd.xlane.f32.xlu0 %v792
  %v818 = vpop.xlane.xlu0 %817
  %819 = vadd.xlane.f32.xlu0 %v793
  %v820 = vpop.xlane.xlu0 %819
  %821 = vadd.xlane.f32.xlu0 %v794
  %v822 = vpop.xlane.xlu0 %821
  %823 = vadd.xlane.f32.xlu0 %v795
  %v824 = vpop.xlane.xlu0 %823
  %825 = vadd.xlane.f32.xlu0 %v796
  %v826 = vpop.xlane.xlu0 %825
  %827 = vadd.xlane.f32.xlu0 %v797
  %v828 = vpop.xlane.xlu0 %827
  %829 = vadd.xlane.f32.xlu0 %v798
  %v830 = vpop.xlane.xlu0 %829
  %s831 = sld [smem:[#allocation2]]
  %v832 = vstv %s831
  %v833 = vadd.f32 %v800, %v832
  %v834 = vadd.f32 %v802, %v832
  %v835 = vadd.f32 %v804, %v832
  %v836 = vadd.f32 %v806, %v832
  %v837 = vadd.f32 %v808, %v832
  %v838 = vadd.f32 %v810, %v832
  %v839 = vadd.f32 %v812, %v832
  %v840 = vadd.f32 %v814, %v832
  %v841 = vadd.f32 %v816, %v832
  %v842 = vadd.f32 %v818, %v832
  %v843 = vadd.f32 %v820, %v832
  %v844 = vadd.f32 %v822, %v832
  %v845 = vadd.f32 %v824, %v832
  %v846 = vadd.f32 %v826, %v832
  %v847 = vadd.f32 %v828, %v832
  %v848 = vadd.f32 %v830, %v832
  %vm849 = vcmask 7168
  %850 = vst.msk [vmem:[%s9] sm:$0xff] %vm849, %v833
  %851 = vst.msk [vmem:[%s9 + $0x8] sm:$0xff] %vm849, %v834
  %852 = vst.msk [vmem:[%s9 + $0x10] sm:$0xff] %vm849, %v835
  %853 = vst.msk [vmem:[%s9 + $0x18] sm:$0xff] %vm849, %v836
  %854 = vst.msk [vmem:[%s9 + $0x20] sm:$0xff] %vm849, %v837
  %855 = vst.msk [vmem:[%s9 + $0x28] sm:$0xff] %vm849, %v838
  %856 = vst.msk [vmem:[%s9 + $0x30] sm:$0xff] %vm849, %v839
  %857 = vst.msk [vmem:[%s9 + $0x38] sm:$0xff] %vm849, %v840
  %858 = vst.msk [vmem:[%s9 + $0x40] sm:$0xff] %vm849, %v841
  %859 = vst.msk [vmem:[%s9 + $0x48] sm:$0xff] %vm849, %v842
  %860 = vst.msk [vmem:[%s9 + $0x50] sm:$0xff] %vm849, %v843
  %861 = vst.msk [vmem:[%s9 + $0x58] sm:$0xff] %vm849, %v844
  %862 = vst.msk [vmem:[%s9 + $0x60] sm:$0xff] %vm849, %v845
  %863 = vst.msk [vmem:[%s9 + $0x68] sm:$0xff] %vm849, %v846
  %864 = vst.msk [vmem:[%s9 + $0x70] sm:$0xff] %vm849, %v847
  %865 = vst.msk [vmem:[%s9 + $0x78] sm:$0xff] %vm849, %v848
  // Predicated region
  $region38: #{tpu_custom_call.1} parent=0 // pred_check
    _
  $region39: #{tpu_custom_call.1} parent=0 // pred_check_branch
    %867 = sbr.rel (0) target = $region41
  $region40: #{tpu_custom_call.1} parent=0 // pred_region
    _
  $region41: #{tpu_custom_call.1} parent=0 // pred_fallthru
    _
  // Predicated region
  $region42: #{tpu_custom_call.1} parent=0 // pred_check
    _
  $region43: #{tpu_custom_call.1} parent=0 // pred_check_branch
    %869 = sbr.rel (0) target = $region45
  $region44: #{tpu_custom_call.1} parent=0 // pred_region
    _
  $region45: #{tpu_custom_call.1} parent=0 // pred_fallthru
    _

</llo_original>
